<compile_context>
chip_gen: v6e
topology: v6e:2x2x1
jax: 0.10.0
libtpu: 0.0.40
codegen_flags: <defaults>
</compile_context>

<pallas_src>
import jax
import jax.numpy as jnp
from jax.experimental import pallas as pl
from jax.experimental.pallas import tpu as pltpu

IN_FEATURES = 768


def lr_kernel(x_ref, wt_ref, b_ref, o_ref):
    # x_ref: [TM, 768] f32, wt_ref: [768, C] f32 (pre-transposed, MXU-native [K, N]),
    # b_ref: [1, C] f32, o_ref: [TM, C] f32.
    # Single-pass bf16 MXU matmul with f32 accumulate.
    x_bf = x_ref[...].astype(jnp.bfloat16)
    w_bf = wt_ref[...].astype(jnp.bfloat16)
    logits = jnp.dot(x_bf, w_bf, preferred_element_type=jnp.float32)
    logits = logits + b_ref[...]                     # broadcast bias over batch (f32)

    # Numerically stable softmax, all in f32.
    m = jnp.max(logits, axis=-1, keepdims=True)
    e = jnp.exp(logits - m)
    denom = jnp.sum(e, axis=-1, keepdims=True)
    o_ref[...] = e * pl.reciprocal(denom, approx=True)   # EUP slot is idle -> free


def lr_forward(x, w, b, *, tm=1024):
    """x: [B, 768], w: [C, 768] (PyTorch nn.Linear layout), b: [C] -> softmax probs [B, C]."""
    B, K = x.shape
    C, Kw = w.shape
    assert K == Kw == IN_FEATURES
    assert tm % 8 == 0, "tm must be a multiple of 8 (f32 sublane tile)"

    # One-time cheap host-side layout fixes (tiny tensors, done by XLA outside the kernel).
    wt = jnp.transpose(w)          # [768, C] — MXU-native [K, N] orientation
    b2 = b.reshape(1, C)

    # TODO(synk): if numerics allow, stream x (and wt) as bf16 from HBM for ~2x bandwidth.

    if B <= tm:
        # Small batch: single full-array VMEM block, no grid / pipeline machinery.
        return pl.pallas_call(
            lr_kernel,
            out_shape=jax.ShapeDtypeStruct((B, C), jnp.float32),
            in_specs=[
                pl.BlockSpec(memory_space=pltpu.MemorySpace.VMEM),
                pl.BlockSpec(memory_space=pltpu.MemorySpace.VMEM),
                pl.BlockSpec(memory_space=pltpu.MemorySpace.VMEM),
            ],
            out_specs=pl.BlockSpec(memory_space=pltpu.MemorySpace.VMEM),
        )(x, wt, b2)

    # Large batch: tile the batch axis; W and bias stay resident across grid steps.
    # TM=1024 f32 x-tile = 3 MiB; double-buffered ~6 MiB -> safe under v5e's 16 MiB
    # default scoped VMEM, and amortizes the per-step pipeline overhead on all chips.
    grid = (pl.cdiv(B, tm),)
    return pl.pallas_call(
        lr_kernel,
        out_shape=jax.ShapeDtypeStruct((B, C), jnp.float32),
        grid=grid,
        in_specs=[
            pl.BlockSpec((tm, K), lambda i: (i, 0)),   # batch tile of x (streamed)
            pl.BlockSpec((K, C), lambda i: (0, 0)),    # W^T resident
            pl.BlockSpec((1, C), lambda i: (0, 0)),    # bias resident
        ],
        out_specs=pl.BlockSpec((tm, C), lambda i: (i, 0)),
        compiler_params=pltpu.CompilerParams(
            dimension_semantics=("parallel",)),        # shard batch across TCs on v7x
    )(x, wt, b2)


if __name__ == "__main__":
    num_classes = 10
    key = jax.random.PRNGKey(0)
    kx, kw, kb, kx2 = jax.random.split(key, 4)

    # Deterministic init mimicking nn.Linear's uniform(-1/sqrt(in), 1/sqrt(in)).
    bound = 1.0 / (IN_FEATURES ** 0.5)
    w = jax.random.uniform(kw, (num_classes, IN_FEATURES),
                           minval=-bound, maxval=bound, dtype=jnp.float32)
    b = jax.random.uniform(kb, (num_classes,),
                           minval=-bound, maxval=bound, dtype=jnp.float32)

    # Small-batch (no-grid) path.
    batch = 8
    x = jax.random.normal(kx, (batch, IN_FEATURES), dtype=jnp.float32)
    out = jax.block_until_ready(lr_forward(x, w, b))
    ref = jax.nn.softmax(x @ w.T + b, axis=1)
    assert out.shape == (batch, num_classes)
    # bf16 matmul operands + approx reciprocal -> relaxed tolerances.
    assert jnp.allclose(out, ref, atol=5e-3, rtol=5e-2)
    assert jnp.allclose(jnp.sum(out, axis=1), 1.0, atol=5e-3)

    # Batch-tiled (grid) path at small test shapes: 2 grid steps (exercises the
    # resident-W pipeline and the "parallel" batch axis). Production default tm=1024.
    big_batch = 64
    x_big = jax.random.normal(kx2, (big_batch, IN_FEATURES), dtype=jnp.float32)
    out_big = jax.block_until_ready(lr_forward(x_big, w, b, tm=32))
    ref_big = jax.nn.softmax(x_big @ w.T + b, axis=1)
    assert out_big.shape == (big_batch, num_classes)
    assert jnp.allclose(out_big, ref_big, atol=5e-3, rtol=5e-2)
    assert jnp.allclose(jnp.sum(out_big, axis=1), 1.0, atol=5e-3)

    print("KERNEL_OK")
</pallas_src>

<mosaic_0001>
module attributes {stable_mosaic.version = 11 : i64} {
  func.func @lr_kernel(%arg0: memref<8x768xf32, #tpu.memory_space<vmem>>, %arg1: memref<768x10xf32, #tpu.memory_space<vmem>>, %arg2: memref<1x10xf32, #tpu.memory_space<vmem>>, %arg3: memref<8x10xf32, #tpu.memory_space<vmem>>) attributes {dimension_semantics = [], scalar_prefetch = 0 : i64, scratch_operands = 0 : i64, tpu.core_type = #tpu.core_type<tc>} {
    %c0 = arith.constant 0 : index
    %c0_0 = arith.constant 0 : index
    %0 = vector.load %arg0[%c0, %c0_0] : memref<8x768xf32, #tpu.memory_space<vmem>>, vector<8x768xf32>
    %1 = arith.truncf %0 : vector<8x768xf32> to vector<8x768xbf16>
    %c0_1 = arith.constant 0 : index
    %c0_2 = arith.constant 0 : index
    %2 = vector.load %arg1[%c0_1, %c0_2] : memref<768x10xf32, #tpu.memory_space<vmem>>, vector<768x10xf32>
    %3 = arith.truncf %2 : vector<768x10xf32> to vector<768x10xbf16>
    %cst = arith.constant dense<0.000000e+00> : vector<8x10xf32>
    %4 = tpu.matmul %1, %3, %cst {dimension_numbers = #tpu.dot_dimension_numbers<[1], [0], [0], [1], [0, 0, 1, 1], [], []>} : vector<8x768xbf16>, vector<768x10xbf16>, vector<8x10xf32> -> vector<8x10xf32>
    %c0_3 = arith.constant 0 : index
    %c0_4 = arith.constant 0 : index
    %5 = vector.load %arg2[%c0_3, %c0_4] : memref<1x10xf32, #tpu.memory_space<vmem>>, vector<1x10xf32>
    %6 = vector.broadcast %5 : vector<1x10xf32> to vector<8x10xf32>
    %7 = arith.addf %4, %6 : vector<8x10xf32>
    %cst_5 = arith.constant dense<0xFF800000> : vector<8xf32>
    %8 = vector.multi_reduction <maximumf>, %7, %cst_5 [1] : vector<8x10xf32> to vector<8xf32>
    %9 = vector.shape_cast %8 : vector<8xf32> to vector<8x1xf32>
    %10 = vector.broadcast %9 : vector<8x1xf32> to vector<8x10xf32>
    %11 = arith.subf %7, %10 : vector<8x10xf32>
    %12 = math.exp %11 : vector<8x10xf32>
    %cst_6 = arith.constant dense<0.000000e+00> : vector<8xf32>
    %13 = vector.multi_reduction <add>, %12, %cst_6 [1] : vector<8x10xf32> to vector<8xf32>
    %14 = vector.shape_cast %13 : vector<8xf32> to vector<8x1xf32>
    %15 = tpu.reciprocal %14 {approx = true} : vector<8x1xf32> -> vector<8x1xf32>
    %16 = vector.broadcast %15 : vector<8x1xf32> to vector<8x10xf32>
    %17 = arith.mulf %12, %16 : vector<8x10xf32>
    %c0_7 = arith.constant 0 : index
    %c0_8 = arith.constant 0 : index
    %18 = vector.load %arg3[%c0_7, %c0_8] : memref<8x10xf32, #tpu.memory_space<vmem>>, vector<8x10xf32>
    tpu.vector_store %arg3[%c0_7, %c0_8], %17 {strides = array<i32>} : memref<8x10xf32, #tpu.memory_space<vmem>>, vector<8x10xf32>,
    return
  }
}

</mosaic_0001>

<llo_original>
// kernel: tpu_custom_call.1
$region0: #{tpu_custom_call.1}
  #allocation0 [shape = 'u32[]', space=smem, size = 0x4, offset = 0x4, fixed_abs, tag = 'smem constant byte address 0x4 - core index']
  #allocation1 [shape = 'u32[144,128]{1,0:T(1,128)}', space=vmem, size = 0x12000, scoped, tag = 'internal scratch']
  %s0 = inlined_call_operand.vmem [shape: f32[8,768], index: 0, kind: input, shape index: {}]
  %s1 = inlined_call_operand.vmem [shape: f32[768,10], index: 1, kind: input, shape index: {}]
  %s2 = inlined_call_operand.vmem [shape: f32[1,10], index: 2, kind: input, shape index: {}]
  %s3 = inlined_call_operand.hbm [shape: f32[8,10], index: 3, kind: output, shape index: {}]
  %s4 = sld [smem:[#allocation0]]
  $region22: #{tpu_custom_call.1} parent=0
    _
  %s6 = ssub.s32 1, %s4
  %s7 = scalar_select 0, %s6, %s4
  $region1: #{tpu_custom_call.1} parent=0
    #allocation2 [shape = 'u8[4096]{0}', space=vmem, size = 0x1000, scoped, tag = 'output window, operand 0, single buffered']
    #allocation3 [shape = 's32[1]{0}', space=sflag, size = 0x4, scoped, tag = 'scoped memory for tpu_custom_call.1']
    %8 = vsyncpa [#allocation3], 0
    // Predicated region
    $region2: #{tpu_custom_call.1} parent=1 // pred_check
      _
    $region3: #{tpu_custom_call.1} parent=1 // pred_check_branch
      %10 = sbr.rel (0) target = $region5
    $region4: #{tpu_custom_call.1} parent=1 // pred_region
      _
    $region5: #{tpu_custom_call.1} parent=1 // pred_fallthru
      _
    // Predicated region
    $region6: #{tpu_custom_call.1} parent=1 // pred_check
      _
    $region7: #{tpu_custom_call.1} parent=1 // pred_check_branch
      %12 = sbr.rel (0) target = $region9
    $region8: #{tpu_custom_call.1} parent=1 // pred_region
      _
    $region9: #{tpu_custom_call.1} parent=1 // pred_fallthru
      _
    // Predicated region
    $region10: #{tpu_custom_call.1} parent=1 // pred_check
      _
    $region11: #{tpu_custom_call.1} parent=1 // pred_check_branch
      %14 = sbr.rel (0) target = $region13
    $region12: #{tpu_custom_call.1} parent=1 // pred_region
      _
    $region13: #{tpu_custom_call.1} parent=1 // pred_fallthru
      _
    %v16 = vld [vmem:[%s0] sm:$0xff]
    %v17 = vld [vmem:[%s0 + $0x8] sm:$0xff]
    %v18 = vld [vmem:[%s0 + $0x10] sm:$0xff]
    %v19 = vld [vmem:[%s0 + $0x18] sm:$0xff]
    %v20 = vld [vmem:[%s0 + $0x20] sm:$0xff]
    %v21 = vld [vmem:[%s0 + $0x28] sm:$0xff]
    %v22 = vpack.c.bf16 %v16, %v16
    %v23 = vpack.c.bf16 %v17, %v17
    %v24 = vpack.c.bf16 %v18, %v18
    %v25 = vpack.c.bf16 %v19, %v19
    %v26 = vpack.c.bf16 %v20, %v20
    %v27 = vpack.c.bf16 %v21, %v21
    %v28 = vld [vmem:[%s1] sm:$0xff]
    %v29 = vld [vmem:[%s1 + $0x8] sm:$0xff]
    %v30 = vld [vmem:[%s1 + $0x10] sm:$0xff]
    %v31 = vld [vmem:[%s1 + $0x18] sm:$0xff]
    %v32 = vld [vmem:[%s1 + $0x20] sm:$0xff]
    %v33 = vld [vmem:[%s1 + $0x28] sm:$0xff]
    %v34 = vld [vmem:[%s1 + $0x30] sm:$0xff]
    %v35 = vld [vmem:[%s1 + $0x38] sm:$0xff]
    %v36 = vld [vmem:[%s1 + $0x40] sm:$0xff]
    %v37 = vld [vmem:[%s1 + $0x48] sm:$0xff]
    %v38 = vld [vmem:[%s1 + $0x50] sm:$0xff]
    %v39 = vld [vmem:[%s1 + $0x58] sm:$0xff]
    %v40 = vld [vmem:[%s1 + $0x60] sm:$0xff]
    %v41 = vld [vmem:[%s1 + $0x68] sm:$0xff]
    %v42 = vld [vmem:[%s1 + $0x70] sm:$0xff]
    %v43 = vld [vmem:[%s1 + $0x78] sm:$0xff]
    %v44 = vld [vmem:[%s1 + $0x80] sm:$0xff]
    %v45 = vld [vmem:[%s1 + $0x88] sm:$0xff]
    %v46 = vld [vmem:[%s1 + $0x90] sm:$0xff]
    %v47 = vld [vmem:[%s1 + $0x98] sm:$0xff]
    %v48 = vld [vmem:[%s1 + $0xa0] sm:$0xff]
    %v49 = vld [vmem:[%s1 + $0xa8] sm:$0xff]
    %v50 = vld [vmem:[%s1 + $0xb0] sm:$0xff]
    %v51 = vld [vmem:[%s1 + $0xb8] sm:$0xff]
    %v52 = vld [vmem:[%s1 + $0xc0] sm:$0xff]
    %v53 = vld [vmem:[%s1 + $0xc8] sm:$0xff]
    %v54 = vld [vmem:[%s1 + $0xd0] sm:$0xff]
    %v55 = vld [vmem:[%s1 + $0xd8] sm:$0xff]
    %v56 = vld [vmem:[%s1 + $0xe0] sm:$0xff]
    %v57 = vld [vmem:[%s1 + $0xe8] sm:$0xff]
    %v58 = vld [vmem:[%s1 + $0xf0] sm:$0xff]
    %v59 = vld [vmem:[%s1 + $0xf8] sm:$0xff]
    %v60 = vld [vmem:[%s1 + $0x100] sm:$0xff]
    %v61 = vld [vmem:[%s1 + $0x108] sm:$0xff]
    %v62 = vld [vmem:[%s1 + $0x110] sm:$0xff]
    %v63 = vld [vmem:[%s1 + $0x118] sm:$0xff]
    %v64 = vld [vmem:[%s1 + $0x120] sm:$0xff]
    %v65 = vld [vmem:[%s1 + $0x128] sm:$0xff]
    %v66 = vld [vmem:[%s1 + $0x130] sm:$0xff]
    %v67 = vld [vmem:[%s1 + $0x138] sm:$0xff]
    %v68 = vld [vmem:[%s1 + $0x140] sm:$0xff]
    %v69 = vld [vmem:[%s1 + $0x148] sm:$0xff]
    %v70 = vld [vmem:[%s1 + $0x150] sm:$0xff]
    %v71 = vld [vmem:[%s1 + $0x158] sm:$0xff]
    %v72 = vld [vmem:[%s1 + $0x160] sm:$0xff]
    %v73 = vld [vmem:[%s1 + $0x168] sm:$0xff]
    %v74 = vld [vmem:[%s1 + $0x170] sm:$0xff]
    %v75 = vld [vmem:[%s1 + $0x178] sm:$0xff]
    %v76 = vld [vmem:[%s1 + $0x180] sm:$0xff]
    %v77 = vld [vmem:[%s1 + $0x188] sm:$0xff]
    %v78 = vld [vmem:[%s1 + $0x190] sm:$0xff]
    %v79 = vld [vmem:[%s1 + $0x198] sm:$0xff]
    %v80 = vld [vmem:[%s1 + $0x1a0] sm:$0xff]
    %v81 = vld [vmem:[%s1 + $0x1a8] sm:$0xff]
    %v82 = vld [vmem:[%s1 + $0x1b0] sm:$0xff]
    %v83 = vld [vmem:[%s1 + $0x1b8] sm:$0xff]
    %v84 = vld [vmem:[%s1 + $0x1c0] sm:$0xff]
    %v85 = vld [vmem:[%s1 + $0x1c8] sm:$0xff]
    %v86 = vld [vmem:[%s1 + $0x1d0] sm:$0xff]
    %v87 = vld [vmem:[%s1 + $0x1d8] sm:$0xff]
    %v88 = vld [vmem:[%s1 + $0x1e0] sm:$0xff]
    %v89 = vld [vmem:[%s1 + $0x1e8] sm:$0xff]
    %v90 = vld [vmem:[%s1 + $0x1f0] sm:$0xff]
    %v91 = vld [vmem:[%s1 + $0x1f8] sm:$0xff]
    %v92 = vld [vmem:[%s1 + $0x200] sm:$0xff]
    %v93 = vld [vmem:[%s1 + $0x208] sm:$0xff]
    %v94 = vld [vmem:[%s1 + $0x210] sm:$0xff]
    %v95 = vld [vmem:[%s1 + $0x218] sm:$0xff]
    %v96 = vld [vmem:[%s1 + $0x220] sm:$0xff]
    %v97 = vld [vmem:[%s1 + $0x228] sm:$0xff]
    %v98 = vld [vmem:[%s1 + $0x230] sm:$0xff]
    %v99 = vld [vmem:[%s1 + $0x238] sm:$0xff]
    %v100 = vld [vmem:[%s1 + $0x240] sm:$0xff]
    %v101 = vld [vmem:[%s1 + $0x248] sm:$0xff]
    %v102 = vld [vmem:[%s1 + $0x250] sm:$0xff]
    %v103 = vld [vmem:[%s1 + $0x258] sm:$0xff]
    %v104 = vld [vmem:[%s1 + $0x260] sm:$0xff]
    %v105 = vld [vmem:[%s1 + $0x268] sm:$0xff]
    %v106 = vld [vmem:[%s1 + $0x270] sm:$0xff]
    %v107 = vld [vmem:[%s1 + $0x278] sm:$0xff]
    %v108 = vld [vmem:[%s1 + $0x280] sm:$0xff]
    %v109 = vld [vmem:[%s1 + $0x288] sm:$0xff]
    %v110 = vld [vmem:[%s1 + $0x290] sm:$0xff]
    %v111 = vld [vmem:[%s1 + $0x298] sm:$0xff]
    %v112 = vld [vmem:[%s1 + $0x2a0] sm:$0xff]
    %v113 = vld [vmem:[%s1 + $0x2a8] sm:$0xff]
    %v114 = vld [vmem:[%s1 + $0x2b0] sm:$0xff]
    %v115 = vld [vmem:[%s1 + $0x2b8] sm:$0xff]
    %v116 = vld [vmem:[%s1 + $0x2c0] sm:$0xff]
    %v117 = vld [vmem:[%s1 + $0x2c8] sm:$0xff]
    %v118 = vld [vmem:[%s1 + $0x2d0] sm:$0xff]
    %v119 = vld [vmem:[%s1 + $0x2d8] sm:$0xff]
    %v120 = vld [vmem:[%s1 + $0x2e0] sm:$0xff]
    %v121 = vld [vmem:[%s1 + $0x2e8] sm:$0xff]
    %v122 = vld [vmem:[%s1 + $0x2f0] sm:$0xff]
    %v123 = vld [vmem:[%s1 + $0x2f8] sm:$0xff]
    %v124 = vpack.c.bf16 %v29, %v28
    %v125 = vpack.c.bf16 %v31, %v30
    %v126 = vpack.c.bf16 %v33, %v32
    %v127 = vpack.c.bf16 %v35, %v34
    %v128 = vpack.c.bf16 %v37, %v36
    %v129 = vpack.c.bf16 %v39, %v38
    %v130 = vpack.c.bf16 %v41, %v40
    %v131 = vpack.c.bf16 %v43, %v42
    %v132 = vpack.c.bf16 %v45, %v44
    %v133 = vpack.c.bf16 %v47, %v46
    %v134 = vpack.c.bf16 %v49, %v48
    %v135 = vpack.c.bf16 %v51, %v50
    %v136 = vpack.c.bf16 %v53, %v52
    %v137 = vpack.c.bf16 %v55, %v54
    %v138 = vpack.c.bf16 %v57, %v56
    %v139 = vpack.c.bf16 %v59, %v58
    %v140 = vpack.c.bf16 %v61, %v60
    %v141 = vpack.c.bf16 %v63, %v62
    %v142 = vpack.c.bf16 %v65, %v64
    %v143 = vpack.c.bf16 %v67, %v66
    %v144 = vpack.c.bf16 %v69, %v68
    %v145 = vpack.c.bf16 %v71, %v70
    %v146 = vpack.c.bf16 %v73, %v72
    %v147 = vpack.c.bf16 %v75, %v74
    %v148 = vpack.c.bf16 %v77, %v76
    %v149 = vpack.c.bf16 %v79, %v78
    %v150 = vpack.c.bf16 %v81, %v80
    %v151 = vpack.c.bf16 %v83, %v82
    %v152 = vpack.c.bf16 %v85, %v84
    %v153 = vpack.c.bf16 %v87, %v86
    %v154 = vpack.c.bf16 %v89, %v88
    %v155 = vpack.c.bf16 %v91, %v90
    %v156 = vpack.c.bf16 %v93, %v92
    %v157 = vpack.c.bf16 %v95, %v94
    %v158 = vpack.c.bf16 %v97, %v96
    %v159 = vpack.c.bf16 %v99, %v98
    %v160 = vpack.c.bf16 %v101, %v100
    %v161 = vpack.c.bf16 %v103, %v102
    %v162 = vpack.c.bf16 %v105, %v104
    %v163 = vpack.c.bf16 %v107, %v106
    %v164 = vpack.c.bf16 %v109, %v108
    %v165 = vpack.c.bf16 %v111, %v110
    %v166 = vpack.c.bf16 %v113, %v112
    %v167 = vpack.c.bf16 %v115, %v114
    %v168 = vpack.c.bf16 %v117, %v116
    %v169 = vpack.c.bf16 %v119, %v118
    %v170 = vpack.c.bf16 %v121, %v120
    %v171 = vpack.c.bf16 %v123, %v122
    %v172 = vld [vmem:[%s2] sm:$0x1]
    %v174 = vlaneseq
    %v175 = vshrl.u32 %v174, 7
    %v176 = vsub.s32 0, %v175
    %v177 = vrot.slane %v172, %v176
    %179 = vmatprep.subr.bf16.mxu0 0
    %180 = vmatpush1.bf16.msra.mxu0 %v131
    %181 = vmatprep.subr.bf16.mxu0 0
    %182 = vmatpush1.bf16.msra.mxu0 %v130
    %183 = vmatprep.subr.bf16.mxu0 0
    %184 = vmatpush1.bf16.msra.mxu0 %v129
    %185 = vmatprep.subr.bf16.mxu0 0
    %186 = vmatpush1.bf16.msra.mxu0 %v128
    %187 = vmatprep.subr.bf16.mxu0 0
    %188 = vmatpush1.bf16.msra.mxu0 %v127
    %189 = vmatprep.subr.bf16.mxu0 0
    %190 = vmatpush1.bf16.msra.mxu0 %v126
    %191 = vmatprep.subr.bf16.mxu0 0
    %192 = vmatpush1.bf16.msra.mxu0 %v125
    %193 = vmatprep.subr.bf16.mxu0 0
    %194 = vmatpush1.bf16.msra.mxu0 %v124
    %195 = vmatprep.subr.bf16.mxu0 0
    %196 = vmatpush2.bf16.msra.mxu0 %v139
    %197 = vmatprep.subr.bf16.mxu0 0
    %198 = vmatpush2.bf16.msra.mxu0 %v138
    %199 = vmatprep.subr.bf16.mxu0 0
    %200 = vmatpush2.bf16.msra.mxu0 %v137
    %201 = vmatprep.subr.bf16.mxu0 0
    %202 = vmatpush2.bf16.msra.mxu0 %v136
    %203 = vmatprep.subr.bf16.mxu0 0
    %204 = vmatpush2.bf16.msra.mxu0 %v135
    %205 = vmatprep.subr.bf16.mxu0 0
    %206 = vmatpush2.bf16.msra.mxu0 %v134
    %207 = vmatprep.subr.bf16.mxu0 0
    %208 = vmatpush2.bf16.msra.mxu0 %v133
    %209 = vmatprep.subr.bf16.mxu0 0
    %210 = vmatpush2.bf16.msra.mxu0 %v132
    %211 = vmatprep.mubr.bf16.mxu0 %v23
    %212 = vmatmul.mubr.bf16.gmra.mxu0 %v22
    %v213 = vpop.f32.mrf.mxu0
    %v214 = vadd.f32 %v177, %v213
    %v215 = vpop.f32.mrf.mxu0
    %v216 = vpop.f32.mrf.mxu0
    %v217 = vpop.f32.mrf.mxu0
    %218 = vdwg.mxu0
    %219 = vmatprep.subr.bf16.mxu0 0
    %220 = vmatpush1.bf16.msra.mxu0 %v147
    %221 = vmatprep.subr.bf16.mxu0 0
    %222 = vmatpush1.bf16.msra.mxu0 %v146
    %223 = vmatprep.subr.bf16.mxu0 0
    %224 = vmatpush1.bf16.msra.mxu0 %v145
    %225 = vmatprep.subr.bf16.mxu0 0
    %226 = vmatpush1.bf16.msra.mxu0 %v144
    %227 = vmatprep.subr.bf16.mxu0 0
    %228 = vmatpush1.bf16.msra.mxu0 %v143
    %229 = vmatprep.subr.bf16.mxu0 0
    %230 = vmatpush1.bf16.msra.mxu0 %v142
    %231 = vmatprep.subr.bf16.mxu0 0
    %232 = vmatpush1.bf16.msra.mxu0 %v141
    %233 = vmatprep.subr.bf16.mxu0 0
    %234 = vmatpush1.bf16.msra.mxu0 %v140
    %235 = vmatprep.subr.bf16.mxu0 0
    %236 = vmatpush2.bf16.msra.mxu0 %v155
    %237 = vmatprep.subr.bf16.mxu0 0
    %238 = vmatpush2.bf16.msra.mxu0 %v154
    %239 = vmatprep.subr.bf16.mxu0 0
    %240 = vmatpush2.bf16.msra.mxu0 %v153
    %241 = vmatprep.subr.bf16.mxu0 0
    %242 = vmatpush2.bf16.msra.mxu0 %v152
    %243 = vmatprep.subr.bf16.mxu0 0
    %244 = vmatpush2.bf16.msra.mxu0 %v151
    %245 = vmatprep.subr.bf16.mxu0 0
    %246 = vmatpush2.bf16.msra.mxu0 %v150
    %247 = vmatprep.subr.bf16.mxu0 0
    %248 = vmatpush2.bf16.msra.mxu0 %v149
    %249 = vmatprep.subr.bf16.mxu0 0
    %250 = vmatpush2.bf16.msra.mxu0 %v148
    %251 = vmatprep.mubr.bf16.mxu0 %v25
    %252 = vmatmul.mubr.bf16.gmra.mxu0 %v24
    %v253 = vpop.f32.mrf.mxu0
    %v254 = vadd.f32 %v214, %v253
    %v255 = vpop.f32.mrf.mxu0
    %v256 = vpop.f32.mrf.mxu0
    %v257 = vpop.f32.mrf.mxu0
    %258 = vdwg.mxu0
    %259 = vmatprep.subr.bf16.mxu0 0
    %260 = vmatpush1.bf16.msra.mxu0 %v163
    %261 = vmatprep.subr.bf16.mxu0 0
    %262 = vmatpush1.bf16.msra.mxu0 %v162
    %263 = vmatprep.subr.bf16.mxu0 0
    %264 = vmatpush1.bf16.msra.mxu0 %v161
    %265 = vmatprep.subr.bf16.mxu0 0
    %266 = vmatpush1.bf16.msra.mxu0 %v160
    %267 = vmatprep.subr.bf16.mxu0 0
    %268 = vmatpush1.bf16.msra.mxu0 %v159
    %269 = vmatprep.subr.bf16.mxu0 0
    %270 = vmatpush1.bf16.msra.mxu0 %v158
    %271 = vmatprep.subr.bf16.mxu0 0
    %272 = vmatpush1.bf16.msra.mxu0 %v157
    %273 = vmatprep.subr.bf16.mxu0 0
    %274 = vmatpush1.bf16.msra.mxu0 %v156
    %275 = vmatprep.subr.bf16.mxu0 0
    %276 = vmatpush2.bf16.msra.mxu0 %v171
    %277 = vmatprep.subr.bf16.mxu0 0
    %278 = vmatpush2.bf16.msra.mxu0 %v170
    %279 = vmatprep.subr.bf16.mxu0 0
    %280 = vmatpush2.bf16.msra.mxu0 %v169
    %281 = vmatprep.subr.bf16.mxu0 0
    %282 = vmatpush2.bf16.msra.mxu0 %v168
    %283 = vmatprep.subr.bf16.mxu0 0
    %284 = vmatpush2.bf16.msra.mxu0 %v167
    %285 = vmatprep.subr.bf16.mxu0 0
    %286 = vmatpush2.bf16.msra.mxu0 %v166
    %287 = vmatprep.subr.bf16.mxu0 0
    %288 = vmatpush2.bf16.msra.mxu0 %v165
    %289 = vmatprep.subr.bf16.mxu0 0
    %290 = vmatpush2.bf16.msra.mxu0 %v164
    %291 = vmatprep.mubr.bf16.mxu0 %v27
    %292 = vmatmul.mubr.bf16.gmra.mxu0 %v26
    %v293 = vpop.f32.mrf.mxu0
    %v294 = vadd.f32 %v254, %v293
    %v295 = vpop.f32.mrf.mxu0
    %v296 = vpop.f32.mrf.mxu0
    %v297 = vpop.f32.mrf.mxu0
    %298 = vdwg.mxu0
    %vm299 = vcmask 80896
    %v300 = vsel %vm299, %v294, -inf
    %301 = vmax.xlane.f32.xlu0 %v300
    %v302 = vpop.xlane.xlu0 %301
    %v303 = vsub.f32 %v294, %v302
    %v304 = vmul.f32 %v303, 1.442695
    %v305 = vpow.pop %v304
    %v306 = vsel %vm299, %v305, 0.0
    %307 = vadd.xlane.f32.xlu0 %v306
    %v308 = vpop.xlane.xlu0 %307
    %v309 = vrcp.pop %v308
    %v310 = vmul.f32 %v305, %v309
    %311 = vst.msk [vmem:[#allocation2] sm:$0xff] %vm299, %v310
    // Predicated region
    $region14: #{tpu_custom_call.1} parent=1 // pred_check
      _
    $region15: #{tpu_custom_call.1} parent=1 // pred_check_branch
      %313 = sbr.rel (0) target = $region17
    $region16: #{tpu_custom_call.1} parent=1 // pred_region
      %s315 = ssub.s32 128, 128
      %316 = vsyncadd [#allocation3], %s315
      %s318 = sshll.u32 [#allocation2], 4
      %s319 = int_to_ptr.vmem [resolvable:$true] %s318
      %321 = dma.vmem_to_hbm [thread:$0]  %s319, 128, %s3, [#allocation3]
    $region17: #{tpu_custom_call.1} parent=1 // pred_fallthru
      _
    // Predicated region
    $region18: #{tpu_custom_call.1} parent=1 // pred_check
      _
    $region19: #{tpu_custom_call.1} parent=1 // pred_check_branch
      %323 = sbr.rel (0) target = $region21
    $region20: #{tpu_custom_call.1} parent=1 // pred_region
      %324 = dma.done [#allocation3], 128
    $region21: #{tpu_custom_call.1} parent=1 // pred_fallthru
      _
    %325 = vsyncpa [#allocation3], 1

</llo_original>
